<compile_context>
chip_gen: v7x
topology: tpu7x:2x2x1
jax: 0.10.0
libtpu: 0.0.40
codegen_flags: <defaults>
</compile_context>

<pallas_src>
import jax
import jax.numpy as jnp
from jax.experimental import pallas as pl
from jax.experimental.pallas import tpu as pltpu

HIDDEN = 64            # ValueNet hidden width (nn.Linear(in_dim, 64))
TB_MAX = 2048          # max batch rows per grid step
SPLIT_MIN_ROWS = 256   # force an even tile count above this (v7x megacore balance)


def _round_up(x, m):
    return (x + m - 1) // m * m


def _orthogonal(key, shape, gain):
    """Deterministic orthogonal init matching torch.nn.init.orthogonal_ semantics."""
    rows, cols = shape
    n = max(rows, cols)
    a = jax.random.normal(key, (n, n), dtype=jnp.float32)
    q, r = jnp.linalg.qr(a)
    d = jnp.diag(r)
    q = q * jnp.where(d >= 0, 1.0, -1.0)       # robust sign correction
    return (gain * q[:rows, :cols]).astype(jnp.float32)


def init_value_net_params(key, in_dim, out_dim):
    """Replicates ValueNet.__init__ parameter shapes with layer_init()."""
    k1, k2, k3 = jax.random.split(key, 3)
    std = float(jnp.sqrt(2.0))
    # PyTorch Linear weight is (out, in); we store the transpose (in, out)
    # so the kernel computes plain  x @ W + b.
    w1 = _orthogonal(k1, (HIDDEN, in_dim), std).T          # (in_dim, 64)
    w2 = _orthogonal(k2, (HIDDEN, HIDDEN), std).T          # (64, 64)
    w3 = _orthogonal(k3, (out_dim, HIDDEN), 1.0).T         # (64, out_dim)
    b1 = jnp.zeros((1, HIDDEN), jnp.float32)
    b2 = jnp.zeros((1, HIDDEN), jnp.float32)
    b3 = jnp.zeros((1, out_dim), jnp.float32)
    return (w1, b1, w2, b2, w3, b3)


def _value_net_kernel(x_ref, w1_ref, b1_ref, w2_ref, b2_ref, w3_ref, b3_ref,
                      out_ref):
    # Layer 1: Linear(in_dim, 64) + ReLU   (MXU matmul, f32 accumulate)
    h = jnp.dot(x_ref[...], w1_ref[...], preferred_element_type=jnp.float32)
    h = jnp.maximum(h + b1_ref[...], 0.0)
    # Layer 2: Linear(64, 64) + ReLU
    h = jnp.dot(h, w2_ref[...], preferred_element_type=jnp.float32)
    h = jnp.maximum(h + b2_ref[...], 0.0)
    # Layer 3: Linear(64, out_dim), no activation -> narrow (tb, out_dim) block,
    # only out_dim*4 bytes per row of HBM writeback.
    o = jnp.dot(h, w3_ref[...], preferred_element_type=jnp.float32)
    out_ref[...] = (o + b3_ref[...]).astype(out_ref.dtype)


@jax.jit
def value_net_forward(obs, params):
    """ValueNet.forward: obs (B, in_dim) float32 -> (B, out_dim) float32."""
    w1, b1, w2, b2, w3, b3 = params
    B, in_dim = obs.shape
    hidden = w1.shape[1]
    out_dim = w3.shape[1]

    # --- balanced batch tiling (all static under jit) -----------------------
    n_tiles = pl.cdiv(B, TB_MAX)
    if B >= SPLIT_MIN_ROWS and n_tiles % 2 == 1:
        n_tiles += 1                       # even tile count -> both v7x cores busy
    tb = _round_up(pl.cdiv(B, n_tiles), 8)
    b_total = n_tiles * tb
    obs_p = jnp.pad(obs, ((0, b_total - B), (0, 0)))

    # Weights/biases: constant index_map -> resident in VMEM across grid steps.
    const = lambda shape: pl.BlockSpec(shape, lambda i: (0, 0))

    flops = 2 * b_total * (in_dim * hidden + hidden * hidden + hidden * out_dim)
    bytes_accessed = 4 * (b_total * (in_dim + out_dim)
                          + in_dim * hidden + hidden * hidden + hidden * out_dim
                          + 2 * hidden + out_dim)

    out = pl.pallas_call(
        _value_net_kernel,
        out_shape=jax.ShapeDtypeStruct((b_total, out_dim), jnp.float32),
        grid=(n_tiles,),
        in_specs=[
            pl.BlockSpec((tb, in_dim), lambda i: (i, 0)),      # obs tile
            const((in_dim, hidden)), const((1, hidden)),       # W1, b1
            const((hidden, hidden)), const((1, hidden)),       # W2, b2
            const((hidden, out_dim)), const((1, out_dim)),     # W3, b3
        ],
        out_specs=pl.BlockSpec((tb, out_dim), lambda i: (i, 0)),
        compiler_params=pltpu.CompilerParams(
            dimension_semantics=("parallel",),                 # megacore on v7x
            vmem_limit_bytes=32 * 1024 * 1024),                # safe for tb=2048 on v5e
        cost_estimate=pl.CostEstimate(flops=flops, transcendentals=0,
                                      bytes_accessed=bytes_accessed),
    )(obs_p, w1, b1, w2, b2, w3, b3)

    return out[:B, :]


def value_net_ref(obs, params):
    """Pure-JAX reference for correctness checking."""
    w1, b1, w2, b2, w3, b3 = params
    h = jnp.maximum(obs @ w1 + b1, 0.0)
    h = jnp.maximum(h @ w2 + b2, 0.0)
    return h @ w3 + b3


if __name__ == "__main__":
    key = jax.random.PRNGKey(0)
    k_obs, k_par = jax.random.split(key)

    in_dim, out_dim = 16, 1           # PPO-critic-like shapes
    params = init_value_net_params(k_par, in_dim, out_dim)

    # B=2: tiny single tile; B=37: in-tile row padding; B=2500: 2 balanced tiles.
    for B in (2, 37, 2500):
        obs = jax.random.normal(jax.random.fold_in(k_obs, B), (B, in_dim),
                                dtype=jnp.float32)
        out = jax.block_until_ready(value_net_forward(obs, params))
        ref = value_net_ref(obs, params)
        assert out.shape == (B, out_dim)
        assert jnp.allclose(out, ref, atol=1e-4, rtol=1e-4), f"mismatch at B={B}"

    print("KERNEL_OK")
</pallas_src>

<mosaic_0001>
module attributes {stable_mosaic.version = 11 : i64} {
  func.func @_value_net_kernel(%arg0: i32, %arg1: memref<8x16xf32, #tpu.memory_space<vmem>>, %arg2: memref<16x64xf32, #tpu.memory_space<vmem>>, %arg3: memref<1x64xf32, #tpu.memory_space<vmem>>, %arg4: memref<64x64xf32, #tpu.memory_space<vmem>>, %arg5: memref<1x64xf32, #tpu.memory_space<vmem>>, %arg6: memref<64x1xf32, #tpu.memory_space<vmem>>, %arg7: memref<1x1xf32, #tpu.memory_space<vmem>>, %arg8: memref<8x1xf32, #tpu.memory_space<vmem>>) attributes {dimension_semantics = [#tpu.dimension_semantics<parallel>], iteration_bounds = array<i64: 1>, scalar_prefetch = 0 : i64, scratch_operands = 0 : i64, tpu.core_type = #tpu.core_type<tc>, window_params = [{transform_indices = @transform_0, window_bounds = array<i64: 8, 16>}, {pipeline_mode = #tpu.pipeline_mode<synchronous>, transform_indices = @transform_1, window_bounds = array<i64: 16, 64>}, {pipeline_mode = #tpu.pipeline_mode<synchronous>, transform_indices = @transform_2, window_bounds = array<i64: 1, 64>}, {pipeline_mode = #tpu.pipeline_mode<synchronous>, transform_indices = @transform_3, window_bounds = array<i64: 64, 64>}, {pipeline_mode = #tpu.pipeline_mode<synchronous>, transform_indices = @transform_4, window_bounds = array<i64: 1, 64>}, {pipeline_mode = #tpu.pipeline_mode<synchronous>, transform_indices = @transform_5, window_bounds = array<i64: 64, 1>}, {pipeline_mode = #tpu.pipeline_mode<synchronous>, transform_indices = @transform_6, window_bounds = array<i64: 1, 1>}, {transform_indices = @transform_7, window_bounds = array<i64: 8, 1>}]} {
    %c0 = arith.constant 0 : index
    %c0_0 = arith.constant 0 : index
    %0 = vector.load %arg1[%c0, %c0_0] : memref<8x16xf32, #tpu.memory_space<vmem>>, vector<8x16xf32>
    %c0_1 = arith.constant 0 : index
    %c0_2 = arith.constant 0 : index
    %1 = vector.load %arg2[%c0_1, %c0_2] : memref<16x64xf32, #tpu.memory_space<vmem>>, vector<16x64xf32>
    %cst = arith.constant dense<0.000000e+00> : vector<8x64xf32>
    %2 = tpu.matmul %0, %1, %cst {dimension_numbers = #tpu.dot_dimension_numbers<[1], [0], [0], [1], [0, 0, 1, 1], [], []>} : vector<8x16xf32>, vector<16x64xf32>, vector<8x64xf32> -> vector<8x64xf32>
    %c0_3 = arith.constant 0 : index
    %c0_4 = arith.constant 0 : index
    %3 = vector.load %arg3[%c0_3, %c0_4] : memref<1x64xf32, #tpu.memory_space<vmem>>, vector<1x64xf32>
    %4 = vector.broadcast %3 : vector<1x64xf32> to vector<8x64xf32>
    %5 = arith.addf %2, %4 : vector<8x64xf32>
    %cst_5 = arith.constant 0.000000e+00 : f32
    %6 = vector.broadcast %cst_5 : f32 to vector<8x64xf32>
    %7 = arith.maximumf %5, %6 : vector<8x64xf32>
    %c0_6 = arith.constant 0 : index
    %c0_7 = arith.constant 0 : index
    %8 = vector.load %arg4[%c0_6, %c0_7] : memref<64x64xf32, #tpu.memory_space<vmem>>, vector<64x64xf32>
    %cst_8 = arith.constant dense<0.000000e+00> : vector<8x64xf32>
    %9 = tpu.matmul %7, %8, %cst_8 {dimension_numbers = #tpu.dot_dimension_numbers<[1], [0], [0], [1], [0, 0, 1, 1], [], []>} : vector<8x64xf32>, vector<64x64xf32>, vector<8x64xf32> -> vector<8x64xf32>
    %c0_9 = arith.constant 0 : index
    %c0_10 = arith.constant 0 : index
    %10 = vector.load %arg5[%c0_9, %c0_10] : memref<1x64xf32, #tpu.memory_space<vmem>>, vector<1x64xf32>
    %11 = vector.broadcast %10 : vector<1x64xf32> to vector<8x64xf32>
    %12 = arith.addf %9, %11 : vector<8x64xf32>
    %cst_11 = arith.constant 0.000000e+00 : f32
    %13 = vector.broadcast %cst_11 : f32 to vector<8x64xf32>
    %14 = arith.maximumf %12, %13 : vector<8x64xf32>
    %c0_12 = arith.constant 0 : index
    %c0_13 = arith.constant 0 : index
    %15 = vector.load %arg6[%c0_12, %c0_13] : memref<64x1xf32, #tpu.memory_space<vmem>>, vector<64x1xf32>
    %cst_14 = arith.constant dense<0.000000e+00> : vector<8x1xf32>
    %16 = tpu.matmul %14, %15, %cst_14 {dimension_numbers = #tpu.dot_dimension_numbers<[1], [0], [0], [1], [0, 0, 1, 1], [], []>} : vector<8x64xf32>, vector<64x1xf32>, vector<8x1xf32> -> vector<8x1xf32>
    %c0_15 = arith.constant 0 : index
    %c0_16 = arith.constant 0 : index
    %17 = vector.load %arg7[%c0_15, %c0_16] : memref<1x1xf32, #tpu.memory_space<vmem>>, vector<1x1xf32>
    %18 = vector.broadcast %17 : vector<1x1xf32> to vector<8x1xf32>
    %19 = arith.addf %16, %18 : vector<8x1xf32>
    %c0_17 = arith.constant 0 : index
    %c0_18 = arith.constant 0 : index
    %20 = vector.load %arg8[%c0_17, %c0_18] : memref<8x1xf32, #tpu.memory_space<vmem>>, vector<8x1xf32>
    tpu.vector_store %arg8[%c0_17, %c0_18], %19 {strides = array<i32>} : memref<8x1xf32, #tpu.memory_space<vmem>>, vector<8x1xf32>,
    return
  }
  func.func @transform_0(%arg0: i32) -> (i32, i32) {
    %c0_i32 = arith.constant 0 : i32
    %c0_i32_0 = arith.constant 0 : i32
    return %arg0, %c0_i32 : i32, i32
  }
  func.func @transform_1(%arg0: i32) -> (i32, i32) {
    %c0_i32 = arith.constant 0 : i32
    %c0_i32_0 = arith.constant 0 : i32
    %c0_i32_1 = arith.constant 0 : i32
    return %c0_i32, %c0_i32_0 : i32, i32
  }
  func.func @transform_2(%arg0: i32) -> (i32, i32) {
    %c0_i32 = arith.constant 0 : i32
    %c0_i32_0 = arith.constant 0 : i32
    %c0_i32_1 = arith.constant 0 : i32
    return %c0_i32, %c0_i32_0 : i32, i32
  }
  func.func @transform_3(%arg0: i32) -> (i32, i32) {
    %c0_i32 = arith.constant 0 : i32
    %c0_i32_0 = arith.constant 0 : i32
    %c0_i32_1 = arith.constant 0 : i32
    return %c0_i32, %c0_i32_0 : i32, i32
  }
  func.func @transform_4(%arg0: i32) -> (i32, i32) {
    %c0_i32 = arith.constant 0 : i32
    %c0_i32_0 = arith.constant 0 : i32
    %c0_i32_1 = arith.constant 0 : i32
    return %c0_i32, %c0_i32_0 : i32, i32
  }
  func.func @transform_5(%arg0: i32) -> (i32, i32) {
    %c0_i32 = arith.constant 0 : i32
    %c0_i32_0 = arith.constant 0 : i32
    %c0_i32_1 = arith.constant 0 : i32
    return %c0_i32, %c0_i32_0 : i32, i32
  }
  func.func @transform_6(%arg0: i32) -> (i32, i32) {
    %c0_i32 = arith.constant 0 : i32
    %c0_i32_0 = arith.constant 0 : i32
    %c0_i32_1 = arith.constant 0 : i32
    return %c0_i32, %c0_i32_0 : i32, i32
  }
  func.func @transform_7(%arg0: i32) -> (i32, i32) {
    %c0_i32 = arith.constant 0 : i32
    %c0_i32_0 = arith.constant 0 : i32
    return %arg0, %c0_i32 : i32, i32
  }
}

</mosaic_0001>

<llo_original>
// kernel: value_net_forward.1
$region0: #{value_net_forward.1}
  #allocation0 [shape = 'u32[]', space=smem, size = 0x4, offset = 0x4, fixed_abs, tag = 'smem constant byte address 0x4 - core index']
  #allocation1 [shape = 'u32[144,128]{1,0:T(1,128)}', space=vmem, size = 0x12000, scoped, tag = 'internal scratch']
  #allocation2 [shape = 'f32[1,1]{1,0:T(1,128)S(1)}', space=vmem, size = 0x200, scoped, tag = 'scoped memory for value_net_forward.1']
  %s0 = inlined_call_operand.vmem [shape: f32[8,16], index: 0, kind: input, shape index: {}]
  %s1 = inlined_call_operand.vmem [shape: f32[16,64], index: 1, kind: input, shape index: {}]
  %s2 = inlined_call_operand.vmem [shape: f32[1,64], index: 2, kind: input, shape index: {}]
  %s3 = inlined_call_operand.vmem [shape: f32[64,64], index: 3, kind: input, shape index: {}]
  %s4 = inlined_call_operand.vmem [shape: f32[1,64], index: 4, kind: input, shape index: {}]
  %s5 = inlined_call_operand.vmem [shape: f32[64,1], index: 5, kind: input, shape index: {}]
  %s6 = inlined_call_operand.<no memory space> [shape: f32[1,1], index: 6, kind: input, shape index: {}]
  %s7 = inlined_call_operand.vmem [shape: f32[8,1], index: 7, kind: output, shape index: {}]
  %s8 = sld [smem:[#allocation0]]
  $region38: #{value_net_forward.1} parent=0
    _
  %s10 = ssub.s32 1, %s8
  %s11 = scalar_select 0, %s10, %s8
  %v12 = vstv %s6
  %13 = vst [vmem:[#allocation2] sm:$0x1] %v12
  // Predicated region
  $region2: #{value_net_forward.1} parent=0 // pred_check
    _
  $region3: #{value_net_forward.1} parent=0 // pred_check_branch
    %15 = sbr.rel (0) target = $region5
  $region4: #{value_net_forward.1} parent=0 // pred_region
    _
  $region5: #{value_net_forward.1} parent=0 // pred_fallthru
    _
  // Predicated region
  $region6: #{value_net_forward.1} parent=0 // pred_check
    _
  $region7: #{value_net_forward.1} parent=0 // pred_check_branch
    %17 = sbr.rel (0) target = $region9
  $region8: #{value_net_forward.1} parent=0 // pred_region
    _
  $region9: #{value_net_forward.1} parent=0 // pred_fallthru
    _
  // Predicated region
  $region10: #{value_net_forward.1} parent=0 // pred_check
    _
  $region11: #{value_net_forward.1} parent=0 // pred_check_branch
    %19 = sbr.rel (0) target = $region13
  $region12: #{value_net_forward.1} parent=0 // pred_region
    _
  $region13: #{value_net_forward.1} parent=0 // pred_fallthru
    _
  // Predicated region
  $region14: #{value_net_forward.1} parent=0 // pred_check
    _
  $region15: #{value_net_forward.1} parent=0 // pred_check_branch
    %21 = sbr.rel (0) target = $region17
  $region16: #{value_net_forward.1} parent=0 // pred_region
    _
  $region17: #{value_net_forward.1} parent=0 // pred_fallthru
    _
  // Predicated region
  $region18: #{value_net_forward.1} parent=0 // pred_check
    _
  $region19: #{value_net_forward.1} parent=0 // pred_check_branch
    %23 = sbr.rel (0) target = $region21
  $region20: #{value_net_forward.1} parent=0 // pred_region
    _
  $region21: #{value_net_forward.1} parent=0 // pred_fallthru
    _
  // Predicated region
  $region22: #{value_net_forward.1} parent=0 // pred_check
    _
  $region23: #{value_net_forward.1} parent=0 // pred_check_branch
    %25 = sbr.rel (0) target = $region25
  $region24: #{value_net_forward.1} parent=0 // pred_region
    _
  $region25: #{value_net_forward.1} parent=0 // pred_fallthru
    _
  // Predicated region
  $region26: #{value_net_forward.1} parent=0 // pred_check
    _
  $region27: #{value_net_forward.1} parent=0 // pred_check_branch
    %27 = sbr.rel (0) target = $region29
  $region28: #{value_net_forward.1} parent=0 // pred_region
    _
  $region29: #{value_net_forward.1} parent=0 // pred_fallthru
    _
  %v28 = vld [vmem:[%s0] sm:$0xff]
  %v29 = vld [vmem:[%s1] sm:$0xff]
  %v30 = vld [vmem:[%s1 + $0x8] sm:$0xff]
  %v31 = vld [vmem:[%s2] sm:$0x1]
  %v33 = vlaneseq
  %v34 = vshrl.u32 %v33, 7
  %v35 = vsub.s32 0, %v34
  %v36 = vrot.slane %v31, %v35
  %vm38 = vcmask 130048
  %v40 = vsel %vm38, %v28, 0
  %42 = vmatprep.subr.mxu0 0.0
  %43 = vmatpush1.msra.mxu0 %v29
  %44 = vmatprep.subr.mxu0 0.0
  %45 = vmatpush1.msra.mxu0 %v30
  %46 = vmatprep.subr.mxu0 0.0
  %47 = vmatpush1.msra.mxu0 0.0
  %48 = vmatprep.subr.mxu0 0.0
  %49 = vmatpush1.msra.mxu0 0.0
  %50 = vmatprep.subr.mxu0 0.0
  %51 = vmatpush1.msra.mxu0 0.0
  %52 = vmatprep.subr.mxu0 0.0
  %53 = vmatpush1.msra.mxu0 0.0
  %54 = vmatprep.subr.mxu0 0.0
  %55 = vmatpush1.msra.mxu0 0.0
  %56 = vmatprep.subr.mxu0 0.0
  %57 = vmatpush1.msra.mxu0 0.0
  %58 = vmatprep.subr.mxu0 0.0
  %59 = vmatpush1.msra.mxu0 0.0
  %60 = vmatprep.subr.mxu0 0.0
  %61 = vmatpush1.msra.mxu0 0.0
  %62 = vmatprep.subr.mxu0 0.0
  %63 = vmatpush1.msra.mxu0 0.0
  %64 = vmatprep.subr.mxu0 0.0
  %65 = vmatpush1.msra.mxu0 0.0
  %66 = vmatprep.subr.mxu0 0.0
  %67 = vmatpush1.msra.mxu0 0.0
  %68 = vmatprep.subr.mxu0 0.0
  %69 = vmatpush1.msra.mxu0 0.0
  %70 = vmatprep.subr.mxu0 0.0
  %71 = vmatpush1.msra.mxu0 0.0
  %72 = vmatprep.subr.mxu0 0.0
  %73 = vmatpush1.msra.mxu0 0.0
  %74 = vmatprep.subr.mxu0 0.0
  %75 = vmatpush1.msra.mxu0 0.0
  %76 = vmatprep.subr.mxu0 0.0
  %77 = vmatpush1.msra.mxu0 0.0
  %78 = vmatprep.subr.mxu0 0.0
  %79 = vmatpush1.msra.mxu0 0.0
  %80 = vmatprep.subr.mxu0 0.0
  %81 = vmatpush1.msra.mxu0 0.0
  %82 = vmatprep.subr.mxu0 0.0
  %83 = vmatpush1.msra.mxu0 0.0
  %84 = vmatprep.subr.mxu0 0.0
  %85 = vmatpush1.msra.mxu0 0.0
  %86 = vmatprep.subr.mxu0 0.0
  %87 = vmatpush1.msra.mxu0 0.0
  %88 = vmatprep.subr.mxu0 0.0
  %89 = vmatpush1.msra.mxu0 0.0
  %90 = vmatprep.subr.mxu0 0.0
  %91 = vmatpush1.msra.mxu0 0.0
  %92 = vmatprep.subr.mxu0 0.0
  %93 = vmatpush1.msra.mxu0 0.0
  %94 = vmatprep.subr.mxu0 0.0
  %95 = vmatpush1.msra.mxu0 0.0
  %96 = vmatprep.subr.mxu0 0.0
  %97 = vmatpush1.msra.mxu0 0.0
  %98 = vmatprep.subr.mxu0 0.0
  %99 = vmatpush1.msra.mxu0 0.0
  %100 = vmatprep.subr.mxu0 0.0
  %101 = vmatpush1.msra.mxu0 0.0
  %102 = vmatprep.subr.mxu0 0.0
  %103 = vmatpush1.msra.mxu0 0.0
  %104 = vmatprep.subr.mxu0 0.0
  %105 = vmatpush1.msra.mxu0 0.0
  %106 = vmatprep.mubr.f32.mxu0 0.0
  %107 = vmatmul.mubr.f32.gmra.mrb[0].mxu0 %v40
  %v108 = vpop.f32.mrb[0].mxu0
  %v109 = vadd.f32 %v36, %v108
  %v110 = vpop.f32.mrb[0].mxu0
  %111 = vdwg.mxu0
  %v112 = vmax.f32 %v109, 0.0
  %v113 = vld [vmem:[%s3] sm:$0xff]
  %v114 = vld [vmem:[%s3 + $0x8] sm:$0xff]
  %v115 = vld [vmem:[%s3 + $0x10] sm:$0xff]
  %v116 = vld [vmem:[%s3 + $0x18] sm:$0xff]
  %v117 = vld [vmem:[%s3 + $0x20] sm:$0xff]
  %v118 = vld [vmem:[%s3 + $0x28] sm:$0xff]
  %v119 = vld [vmem:[%s3 + $0x30] sm:$0xff]
  %v120 = vld [vmem:[%s3 + $0x38] sm:$0xff]
  %v121 = vld [vmem:[%s4] sm:$0x1]
  %v123 = vlaneseq
  %v124 = vshrl.u32 %v123, 7
  %v125 = vsub.s32 0, %v124
  %v126 = vrot.slane %v121, %v125
  %vm128 = vcmask 523264
  %v130 = vsel %vm128, %v112, 0
  %132 = vmatprep.subr.mxu0 0.0
  %133 = vmatpush1.msra.mxu0 %v113
  %134 = vmatprep.subr.mxu0 0.0
  %135 = vmatpush1.msra.mxu0 %v114
  %136 = vmatprep.subr.mxu0 0.0
  %137 = vmatpush1.msra.mxu0 %v115
  %138 = vmatprep.subr.mxu0 0.0
  %139 = vmatpush1.msra.mxu0 %v116
  %140 = vmatprep.subr.mxu0 0.0
  %141 = vmatpush1.msra.mxu0 %v117
  %142 = vmatprep.subr.mxu0 0.0
  %143 = vmatpush1.msra.mxu0 %v118
  %144 = vmatprep.subr.mxu0 0.0
  %145 = vmatpush1.msra.mxu0 %v119
  %146 = vmatprep.subr.mxu0 0.0
  %147 = vmatpush1.msra.mxu0 %v120
  %148 = vmatprep.subr.mxu0 0.0
  %149 = vmatpush1.msra.mxu0 0.0
  %150 = vmatprep.subr.mxu0 0.0
  %151 = vmatpush1.msra.mxu0 0.0
  %152 = vmatprep.subr.mxu0 0.0
  %153 = vmatpush1.msra.mxu0 0.0
  %154 = vmatprep.subr.mxu0 0.0
  %155 = vmatpush1.msra.mxu0 0.0
  %156 = vmatprep.subr.mxu0 0.0
  %157 = vmatpush1.msra.mxu0 0.0
  %158 = vmatprep.subr.mxu0 0.0
  %159 = vmatpush1.msra.mxu0 0.0
  %160 = vmatprep.subr.mxu0 0.0
  %161 = vmatpush1.msra.mxu0 0.0
  %162 = vmatprep.subr.mxu0 0.0
  %163 = vmatpush1.msra.mxu0 0.0
  %164 = vmatprep.subr.mxu0 0.0
  %165 = vmatpush1.msra.mxu0 0.0
  %166 = vmatprep.subr.mxu0 0.0
  %167 = vmatpush1.msra.mxu0 0.0
  %168 = vmatprep.subr.mxu0 0.0
  %169 = vmatpush1.msra.mxu0 0.0
  %170 = vmatprep.subr.mxu0 0.0
  %171 = vmatpush1.msra.mxu0 0.0
  %172 = vmatprep.subr.mxu0 0.0
  %173 = vmatpush1.msra.mxu0 0.0
  %174 = vmatprep.subr.mxu0 0.0
  %175 = vmatpush1.msra.mxu0 0.0
  %176 = vmatprep.subr.mxu0 0.0
  %177 = vmatpush1.msra.mxu0 0.0
  %178 = vmatprep.subr.mxu0 0.0
  %179 = vmatpush1.msra.mxu0 0.0
  %180 = vmatprep.subr.mxu0 0.0
  %181 = vmatpush1.msra.mxu0 0.0
  %182 = vmatprep.subr.mxu0 0.0
  %183 = vmatpush1.msra.mxu0 0.0
  %184 = vmatprep.subr.mxu0 0.0
  %185 = vmatpush1.msra.mxu0 0.0
  %186 = vmatprep.subr.mxu0 0.0
  %187 = vmatpush1.msra.mxu0 0.0
  %188 = vmatprep.subr.mxu0 0.0
  %189 = vmatpush1.msra.mxu0 0.0
  %190 = vmatprep.subr.mxu0 0.0
  %191 = vmatpush1.msra.mxu0 0.0
  %192 = vmatprep.subr.mxu0 0.0
  %193 = vmatpush1.msra.mxu0 0.0
  %194 = vmatprep.subr.mxu0 0.0
  %195 = vmatpush1.msra.mxu0 0.0
  %196 = vmatprep.mubr.f32.mxu0 0.0
  %197 = vmatmul.mubr.f32.gmra.mrb[0].mxu0 %v130
  %v198 = vpop.f32.mrb[0].mxu0
  %v199 = vadd.f32 %v126, %v198
  %v200 = vpop.f32.mrb[0].mxu0
  %201 = vdwg.mxu0
  %v202 = vmax.f32 %v199, 0.0
  %v203 = vld [vmem:[%s5] sm:$0xff]
  %v204 = vld [vmem:[%s5 + $0x8] sm:$0xff]
  %v205 = vld [vmem:[%s5 + $0x10] sm:$0xff]
  %v206 = vld [vmem:[%s5 + $0x18] sm:$0xff]
  %v207 = vld [vmem:[%s5 + $0x20] sm:$0xff]
  %v208 = vld [vmem:[%s5 + $0x28] sm:$0xff]
  %v209 = vld [vmem:[%s5 + $0x30] sm:$0xff]
  %v210 = vld [vmem:[%s5 + $0x38] sm:$0xff]
  %v211 = vld [vmem:[#allocation2] sm:$0x1]
  %v213 = vlaneseq
  %v214 = vshrl.u32 %v213, 7
  %v215 = vsub.s32 0, %v214
  %v216 = vrot.slane %v211, %v215
  %v219 = vsel %vm128, %v202, 0
  %221 = vmatprep.subr.mxu0 0.0
  %222 = vmatpush1.msra.mxu0 %v203
  %223 = vmatprep.subr.mxu0 0.0
  %224 = vmatpush1.msra.mxu0 %v204
  %225 = vmatprep.subr.mxu0 0.0
  %226 = vmatpush1.msra.mxu0 %v205
  %227 = vmatprep.subr.mxu0 0.0
  %228 = vmatpush1.msra.mxu0 %v206
  %229 = vmatprep.subr.mxu0 0.0
  %230 = vmatpush1.msra.mxu0 %v207
  %231 = vmatprep.subr.mxu0 0.0
  %232 = vmatpush1.msra.mxu0 %v208
  %233 = vmatprep.subr.mxu0 0.0
  %234 = vmatpush1.msra.mxu0 %v209
  %235 = vmatprep.subr.mxu0 0.0
  %236 = vmatpush1.msra.mxu0 %v210
  %237 = vmatprep.subr.mxu0 0.0
  %238 = vmatpush1.msra.mxu0 0.0
  %239 = vmatprep.subr.mxu0 0.0
  %240 = vmatpush1.msra.mxu0 0.0
  %241 = vmatprep.subr.mxu0 0.0
  %242 = vmatpush1.msra.mxu0 0.0
  %243 = vmatprep.subr.mxu0 0.0
  %244 = vmatpush1.msra.mxu0 0.0
  %245 = vmatprep.subr.mxu0 0.0
  %246 = vmatpush1.msra.mxu0 0.0
  %247 = vmatprep.subr.mxu0 0.0
  %248 = vmatpush1.msra.mxu0 0.0
  %249 = vmatprep.subr.mxu0 0.0
  %250 = vmatpush1.msra.mxu0 0.0
  %251 = vmatprep.subr.mxu0 0.0
  %252 = vmatpush1.msra.mxu0 0.0
  %253 = vmatprep.subr.mxu0 0.0
  %254 = vmatpush1.msra.mxu0 0.0
  %255 = vmatprep.subr.mxu0 0.0
  %256 = vmatpush1.msra.mxu0 0.0
  %257 = vmatprep.subr.mxu0 0.0
  %258 = vmatpush1.msra.mxu0 0.0
  %259 = vmatprep.subr.mxu0 0.0
  %260 = vmatpush1.msra.mxu0 0.0
  %261 = vmatprep.subr.mxu0 0.0
  %262 = vmatpush1.msra.mxu0 0.0
  %263 = vmatprep.subr.mxu0 0.0
  %264 = vmatpush1.msra.mxu0 0.0
  %265 = vmatprep.subr.mxu0 0.0
  %266 = vmatpush1.msra.mxu0 0.0
  %267 = vmatprep.subr.mxu0 0.0
  %268 = vmatpush1.msra.mxu0 0.0
  %269 = vmatprep.subr.mxu0 0.0
  %270 = vmatpush1.msra.mxu0 0.0
  %271 = vmatprep.subr.mxu0 0.0
  %272 = vmatpush1.msra.mxu0 0.0
  %273 = vmatprep.subr.mxu0 0.0
  %274 = vmatpush1.msra.mxu0 0.0
  %275 = vmatprep.subr.mxu0 0.0
  %276 = vmatpush1.msra.mxu0 0.0
  %277 = vmatprep.subr.mxu0 0.0
  %278 = vmatpush1.msra.mxu0 0.0
  %279 = vmatprep.subr.mxu0 0.0
  %280 = vmatpush1.msra.mxu0 0.0
  %281 = vmatprep.subr.mxu0 0.0
  %282 = vmatpush1.msra.mxu0 0.0
  %283 = vmatprep.subr.mxu0 0.0
  %284 = vmatpush1.msra.mxu0 0.0
  %285 = vmatprep.mubr.f32.mxu0 0.0
  %286 = vmatmul.mubr.f32.gmra.mrb[0].mxu0 %v219
  %v287 = vpop.f32.mrb[0].mxu0
  %v288 = vadd.f32 %v216, %v287
  %v289 = vpop.f32.mrb[0].mxu0
  %290 = vdwg.mxu0
  %vm291 = vcmask 7168
  %292 = vst.msk [vmem:[%s7] sm:$0xff] %vm291, %v288
  // Predicated region
  $region30: #{value_net_forward.1} parent=0 // pred_check
    _
  $region31: #{value_net_forward.1} parent=0 // pred_check_branch
    %294 = sbr.rel (0) target = $region33
  $region32: #{value_net_forward.1} parent=0 // pred_region
    _
  $region33: #{value_net_forward.1} parent=0 // pred_fallthru
    _
  // Predicated region
  $region34: #{value_net_forward.1} parent=0 // pred_check
    _
  $region35: #{value_net_forward.1} parent=0 // pred_check_branch
    %296 = sbr.rel (0) target = $region37
  $region36: #{value_net_forward.1} parent=0 // pred_region
    _
  $region37: #{value_net_forward.1} parent=0 // pred_fallthru
    _

</llo_original>
